<compile_context>
chip_gen: v7x
topology: tpu7x:2x2x1
jax: 0.10.0
libtpu: 0.0.40
codegen_flags: <defaults>
</compile_context>

<pallas_src>
import jax
import jax.numpy as jnp
from jax.experimental import pallas as pl
from jax.experimental.pallas import tpu as pltpu


def _round_up(x: int, m: int) -> int:
    return (x + m - 1) // m * m


def _gate_kernel(x_ref, w1_ref, b1_ref, w2_ref, b2_ref, o_ref):
    # fc1: Linear + ReLU.  Operands stay in their native dtype (bf16 would
    # feed the MXU directly); accumulation is f32 via preferred_element_type.
    h = jnp.dot(x_ref[...], w1_ref[...],
                preferred_element_type=jnp.float32) + b1_ref[...]
    h = jnp.maximum(h, 0.0)                                   # ReLU
    # fc2: Linear -> gate logits (E is small; stores are masked but write only
    # E lanes/token instead of a 128-lane padded slab).
    o = jnp.dot(h.astype(w2_ref.dtype), w2_ref[...],
                preferred_element_type=jnp.float32) + b2_ref[...]
    o_ref[...] = o.astype(o_ref.dtype)


def dict_moe_gate2(hidden_states, w1_t, b1, w2_t, b2, *, tm=None):
    """Fused gate: relu(x @ w1_t + b1) @ w2_t + b2.

    hidden_states: (B, S, H);  w1_t: (H, H) = fc1.weight.T;  b1: (H,);
    w2_t: (H, E) = fc2.weight.T;  b2: (E,).
    """
    B, S, H = hidden_states.shape
    E = w2_t.shape[1]
    T = B * S
    dtype = hidden_states.dtype

    # Sublane packing: 16 rows/vreg for 16-bit dtypes, 8 for 32-bit.
    sub = 16 if jnp.dtype(dtype).itemsize == 2 else 8
    if tm is None:
        # Large tiles when H is small (per-step bytes are tiny otherwise), but
        # always aim for >= 2 grid steps so the "parallel" axis can shard
        # across both TensorCores on v7x.
        cap = 2048 if H <= 128 else 512
        tm = min(cap, max(sub, _round_up(pl.cdiv(T, 2), sub)))
    tm = max(sub, _round_up(tm, sub))
    tm = min(tm, _round_up(T, sub))       # never larger than the token dim
    grid = pl.cdiv(T, tm)                 # ragged last block handled by Pallas

    x2d = hidden_states.reshape(T, H)     # no jnp.pad: edge block is masked
    b1_2d = b1.reshape(1, H)
    b2_2d = b2.reshape(1, E)

    # Accurate (advisory) cost: real E for fc2 flops, per-array itemsizes.
    cost = pl.CostEstimate(
        flops=2 * T * H * H + 2 * T * H * E,
        transcendentals=0,
        bytes_accessed=(x2d.size * x2d.dtype.itemsize
                        + w1_t.size * w1_t.dtype.itemsize
                        + b1.size * b1.dtype.itemsize
                        + w2_t.size * w2_t.dtype.itemsize
                        + b2.size * b2.dtype.itemsize
                        + T * E * jnp.dtype(dtype).itemsize),
    )

    out2d = pl.pallas_call(
        _gate_kernel,
        out_shape=jax.ShapeDtypeStruct((T, E), dtype),
        grid_spec=pltpu.PrefetchScalarGridSpec(
            num_scalar_prefetch=0,
            grid=(grid,),
            in_specs=[
                pl.BlockSpec((tm, H), lambda i: (i, 0)),   # x tile
                pl.BlockSpec((H, H), lambda i: (0, 0)),    # W1^T (resident)
                pl.BlockSpec((1, H), lambda i: (0, 0)),    # b1
                pl.BlockSpec((H, E), lambda i: (0, 0)),    # W2^T (resident)
                pl.BlockSpec((1, E), lambda i: (0, 0)),    # b2
            ],
            out_specs=pl.BlockSpec((tm, E), lambda i: (i, 0)),
        ),
        compiler_params=pltpu.CompilerParams(
            dimension_semantics=("parallel",)),
        cost_estimate=cost,
    )(x2d, w1_t, b1_2d, w2_t, b2_2d)

    return out2d.reshape(B, S, E)


def _reference(x, w1_t, b1, w2_t, b2):
    h = jnp.maximum(x @ w1_t + b1, 0.0)
    return h @ w2_t + b2


if __name__ == "__main__":
    # Shapes implied by the module: hidden_size=32, num_experts=4,
    # hidden_states = (batch=2, seq=8, hidden=32).
    B, S, H, E = 2, 8, 32, 4
    init_lambda = 0.5

    key = jax.random.PRNGKey(0)
    kx, kw1, kw2, kx2 = jax.random.split(key, 4)
    x = jax.random.normal(kx, (B, S, H), dtype=jnp.float32)

    # --- Parameters exactly as DictMoEGate2.__init__ builds them ---
    # fc1 Linear(H, H): weight & bias zero-initialized.
    # fc2 Linear(H, E): weight zero, bias = init_lambda.
    w1_t = jnp.zeros((H, H), dtype=jnp.float32)   # (in, out) = W1^T
    b1 = jnp.zeros((H,), dtype=jnp.float32)
    w2_t = jnp.zeros((H, E), dtype=jnp.float32)   # (in, out) = W2^T
    b2 = jnp.full((E,), init_lambda, dtype=jnp.float32)

    out = jax.block_until_ready(dict_moe_gate2(x, w1_t, b1, w2_t, b2))
    ref = _reference(x.reshape(-1, H), w1_t, b1, w2_t, b2).reshape(B, S, E)
    assert out.shape == (B, S, E)
    assert jnp.allclose(out, ref, atol=1e-5), "mismatch vs reference (zero init)"

    # Non-trivial weights so the matmul/ReLU path is actually exercised.
    w1_t_r = 0.05 * jax.random.normal(kw1, (H, H), dtype=jnp.float32)
    w2_t_r = 0.05 * jax.random.normal(kw2, (H, E), dtype=jnp.float32)
    out_r = jax.block_until_ready(dict_moe_gate2(x, w1_t_r, b1, w2_t_r, b2))
    ref_r = _reference(x.reshape(-1, H), w1_t_r, b1, w2_t_r, b2).reshape(B, S, E)
    assert jnp.allclose(out_r, ref_r, atol=1e-4), "mismatch vs reference (random)"

    # Ragged / multi-tile path: T=200 tokens.
    #   (a) auto tile -> tm=104, grid=2 (last block partially masked)
    #   (b) explicit tm=128 -> grid=2 with a 72-row edge block
    B2, S2 = 2, 100
    x2 = jax.random.normal(kx2, (B2, S2, H), dtype=jnp.float32)
    ref2 = _reference(x2.reshape(-1, H), w1_t_r, b1, w2_t_r, b2).reshape(B2, S2, E)

    out2a = jax.block_until_ready(dict_moe_gate2(x2, w1_t_r, b1, w2_t_r, b2))
    assert jnp.allclose(out2a, ref2, atol=1e-4), "mismatch vs reference (ragged auto)"

    out2b = jax.block_until_ready(
        dict_moe_gate2(x2, w1_t_r, b1, w2_t_r, b2, tm=128))
    assert jnp.allclose(out2b, ref2, atol=1e-4), "mismatch vs reference (ragged tm=128)"

    print("KERNEL_OK")
</pallas_src>

<mosaic_0001>
module attributes {stable_mosaic.version = 11 : i64} {
  func.func @_gate_kernel(%arg0: i32, %arg1: memref<8x32xf32, #tpu.memory_space<vmem>>, %arg2: memref<32x32xf32, #tpu.memory_space<vmem>>, %arg3: memref<1x32xf32, #tpu.memory_space<vmem>>, %arg4: memref<32x4xf32, #tpu.memory_space<vmem>>, %arg5: memref<1x4xf32, #tpu.memory_space<vmem>>, %arg6: memref<8x4xf32, #tpu.memory_space<vmem>>) attributes {dimension_semantics = [#tpu.dimension_semantics<parallel>], iteration_bounds = array<i64: 2>, scalar_prefetch = 0 : i64, scratch_operands = 0 : i64, tpu.core_type = #tpu.core_type<tc>, window_params = [{transform_indices = @transform_0, window_bounds = array<i64: 8, 32>}, {pipeline_mode = #tpu.pipeline_mode<synchronous>, transform_indices = @transform_1, window_bounds = array<i64: 32, 32>}, {pipeline_mode = #tpu.pipeline_mode<synchronous>, transform_indices = @transform_2, window_bounds = array<i64: 1, 32>}, {pipeline_mode = #tpu.pipeline_mode<synchronous>, transform_indices = @transform_3, window_bounds = array<i64: 32, 4>}, {pipeline_mode = #tpu.pipeline_mode<synchronous>, transform_indices = @transform_4, window_bounds = array<i64: 1, 4>}, {transform_indices = @transform_5, window_bounds = array<i64: 8, 4>}]} {
    %c0 = arith.constant 0 : index
    %c0_0 = arith.constant 0 : index
    %0 = vector.load %arg1[%c0, %c0_0] : memref<8x32xf32, #tpu.memory_space<vmem>>, vector<8x32xf32>
    %c0_1 = arith.constant 0 : index
    %c0_2 = arith.constant 0 : index
    %1 = vector.load %arg2[%c0_1, %c0_2] : memref<32x32xf32, #tpu.memory_space<vmem>>, vector<32x32xf32>
    %cst = arith.constant dense<0.000000e+00> : vector<8x32xf32>
    %2 = tpu.matmul %0, %1, %cst {dimension_numbers = #tpu.dot_dimension_numbers<[1], [0], [0], [1], [0, 0, 1, 1], [], []>} : vector<8x32xf32>, vector<32x32xf32>, vector<8x32xf32> -> vector<8x32xf32>
    %c0_3 = arith.constant 0 : index
    %c0_4 = arith.constant 0 : index
    %3 = vector.load %arg3[%c0_3, %c0_4] : memref<1x32xf32, #tpu.memory_space<vmem>>, vector<1x32xf32>
    %4 = vector.broadcast %3 : vector<1x32xf32> to vector<8x32xf32>
    %5 = arith.addf %2, %4 : vector<8x32xf32>
    %cst_5 = arith.constant 0.000000e+00 : f32
    %6 = vector.broadcast %cst_5 : f32 to vector<8x32xf32>
    %7 = arith.maximumf %5, %6 : vector<8x32xf32>
    %c0_6 = arith.constant 0 : index
    %c0_7 = arith.constant 0 : index
    %8 = vector.load %arg4[%c0_6, %c0_7] : memref<32x4xf32, #tpu.memory_space<vmem>>, vector<32x4xf32>
    %cst_8 = arith.constant dense<0.000000e+00> : vector<8x4xf32>
    %9 = tpu.matmul %7, %8, %cst_8 {dimension_numbers = #tpu.dot_dimension_numbers<[1], [0], [0], [1], [0, 0, 1, 1], [], []>} : vector<8x32xf32>, vector<32x4xf32>, vector<8x4xf32> -> vector<8x4xf32>
    %c0_9 = arith.constant 0 : index
    %c0_10 = arith.constant 0 : index
    %10 = vector.load %arg5[%c0_9, %c0_10] : memref<1x4xf32, #tpu.memory_space<vmem>>, vector<1x4xf32>
    %11 = vector.broadcast %10 : vector<1x4xf32> to vector<8x4xf32>
    %12 = arith.addf %9, %11 : vector<8x4xf32>
    %c0_11 = arith.constant 0 : index
    %c0_12 = arith.constant 0 : index
    %13 = vector.load %arg6[%c0_11, %c0_12] : memref<8x4xf32, #tpu.memory_space<vmem>>, vector<8x4xf32>
    tpu.vector_store %arg6[%c0_11, %c0_12], %12 {strides = array<i32>} : memref<8x4xf32, #tpu.memory_space<vmem>>, vector<8x4xf32>,
    return
  }
  func.func @transform_0(%arg0: i32) -> (i32, i32) {
    %c0_i32 = arith.constant 0 : i32
    %c0_i32_0 = arith.constant 0 : i32
    return %arg0, %c0_i32 : i32, i32
  }
  func.func @transform_1(%arg0: i32) -> (i32, i32) {
    %c0_i32 = arith.constant 0 : i32
    %c0_i32_0 = arith.constant 0 : i32
    %c0_i32_1 = arith.constant 0 : i32
    return %c0_i32, %c0_i32_0 : i32, i32
  }
  func.func @transform_2(%arg0: i32) -> (i32, i32) {
    %c0_i32 = arith.constant 0 : i32
    %c0_i32_0 = arith.constant 0 : i32
    %c0_i32_1 = arith.constant 0 : i32
    return %c0_i32, %c0_i32_0 : i32, i32
  }
  func.func @transform_3(%arg0: i32) -> (i32, i32) {
    %c0_i32 = arith.constant 0 : i32
    %c0_i32_0 = arith.constant 0 : i32
    %c0_i32_1 = arith.constant 0 : i32
    return %c0_i32, %c0_i32_0 : i32, i32
  }
  func.func @transform_4(%arg0: i32) -> (i32, i32) {
    %c0_i32 = arith.constant 0 : i32
    %c0_i32_0 = arith.constant 0 : i32
    %c0_i32_1 = arith.constant 0 : i32
    return %c0_i32, %c0_i32_0 : i32, i32
  }
  func.func @transform_5(%arg0: i32) -> (i32, i32) {
    %c0_i32 = arith.constant 0 : i32
    %c0_i32_0 = arith.constant 0 : i32
    return %arg0, %c0_i32 : i32, i32
  }
}

</mosaic_0001>

<llo_original>
// kernel: tpu_custom_call.1
$region0: #{tpu_custom_call.1}
  #allocation0 [shape = 'u32[]', space=smem, size = 0x4, offset = 0x4, fixed_abs, tag = 'smem constant byte address 0x4 - core index']
  #allocation1 [shape = 'u32[144,128]{1,0:T(1,128)}', space=vmem, size = 0x12000, scoped, tag = 'internal scratch']
  %s0 = inlined_call_operand.hbm [shape: f32[16,32], index: 0, kind: input, shape index: {}]
  %s1 = inlined_call_operand.vmem [shape: f32[32,32], index: 1, kind: input, shape index: {}]
  %s2 = inlined_call_operand.vmem [shape: f32[1,32], index: 2, kind: input, shape index: {}]
  %s3 = inlined_call_operand.vmem [shape: f32[32,4], index: 3, kind: input, shape index: {}]
  %s4 = inlined_call_operand.vmem [shape: f32[1,4], index: 4, kind: input, shape index: {}]
  %s5 = inlined_call_operand.vmem [shape: f32[16,4], index: 5, kind: output, shape index: {}]
  %s6 = sld [smem:[#allocation0]]
  $region57: #{tpu_custom_call.1} parent=0
    _
  %s8 = ssub.s32 1, %s6
  %s9 = scalar_select 0, %s8, %s6
  $region1: #{tpu_custom_call.1} parent=0
    #allocation2 [shape = 'u8[8192]{0}', space=vmem, size = 0x2000, scoped, tag = 'input window, operand 0']
    #allocation3 [shape = 's32[2]{0}', space=sflag, size = 0x8, scoped, tag = 'scoped memory for tpu_custom_call.1']
    %10 = vsyncpa [#allocation3], 0
    %s11 = scalar_lea.sflag [#allocation3], 1
    %12 = vsyncpa %s11, 0
    loop: start=0, step=1, limit=4
    $region2: #{tpu_custom_call.1} parent=1 // loop_pre_header
      _
    $region3: #{tpu_custom_call.1} parent=1 // loop_header
      %s14 = sphi 0, %s18
      %p15 = scmp.ge.s32.totalorder %s14, 4
      %s24 = sphi 0, %s26
      %s27 = sphi 0, %s24
      %s28 = sphi 0, %s27
      %s44 = sphi 0, %s28
      %s48 = sphi 0, %s48
      %s50 = sphi 0, %s48
      %s51 = sphi 0, %s50
      %s65 = sphi 0, %s51
      %s69 = sphi 0, %s69
      %s71 = sphi 0, %s69
      %s72 = sphi 0, %s71
      %s86 = sphi 0, %s72
      %s90 = sphi 0, %s90
      %s92 = sphi 0, %s90
      %s93 = sphi 0, %s92
      %s107 = sphi 0, %s93
      %s111 = sphi 0, %s111
      %s113 = sphi 0, %s111
      %s114 = sphi 0, %s113
      %s128 = sphi 0, %s114
      %s134 = sphi 0, %s136
      %s137 = sphi 0, %s134
      %s138 = sphi 0, %s137
      %s154 = sphi 0, %s138
    $region4: #{tpu_custom_call.1} parent=1 // loop_header_branch
      %17 = sbr.rel (%p15) target = $region8
    $region5: #{tpu_custom_call.1} parent=1 // loop_body
      %s19 = ssub.s32 %s14, 1
      %s20 = ssub.s32 %s14, 2
      %s21 = sadd.s32 %s14, 1
      %s22 = ssub.s32 %s14, %s21
      %p23 = scmp.eq.s32.totalorder %s22, 0
      %s25 = sadd.s32 %s24, 1
      %s26 = scalar_select %p23, %s24, %s25
      %p29 = pneg %p23
      %p30 = scmp.eq.s32.totalorder %s14, 1
      %p31 = por %p29, %p30
      %p32 = scmp.ne.s32.totalorder %s24, %s27
      %p33 = scmp.eq.s32.totalorder %s14, 0
      %p34 = por %p32, %p33
      %p35 = scmp.ne.s32.totalorder %s24, %s27
      %p36 = scmp.eq.s32.totalorder %s19, 1
      %p37 = por %p35, %p36
      %p38 = scmp.ne.s32.totalorder %s27, %s28
      %p39 = scmp.eq.s32.totalorder %s19, 0
      %p40 = por %p38, %p39
      %p41 = scmp.ne.s32.totalorder %s27, %s28
      %p42 = scmp.eq.s32.totalorder %s20, 1
      %p43 = por %p41, %p42
      %p45 = scmp.ne.s32.totalorder %s28, %s44
      %p46 = scmp.eq.s32.totalorder %s20, 0
      %p47 = por %p45, %p46
      %s49 = sadd.s32 %s48, 1
      %p52 = scmp.eq.s32.totalorder %s14, 1
      %p53 = scmp.ne.s32.totalorder %s48, %s50
      %p54 = scmp.eq.s32.totalorder %s14, 0
      %p55 = por %p53, %p54
      %p56 = scmp.ne.s32.totalorder %s48, %s50
      %p57 = scmp.eq.s32.totalorder %s19, 1
      %p58 = por %p56, %p57
      %p59 = scmp.ne.s32.totalorder %s50, %s51
      %p60 = scmp.eq.s32.totalorder %s19, 0
      %p61 = por %p59, %p60
      %p62 = scmp.ne.s32.totalorder %s50, %s51
      %p63 = scmp.eq.s32.totalorder %s20, 1
      %p64 = por %p62, %p63
      %p66 = scmp.ne.s32.totalorder %s51, %s65
      %p67 = scmp.eq.s32.totalorder %s20, 0
      %p68 = por %p66, %p67
      %s70 = sadd.s32 %s69, 1
      %p73 = scmp.eq.s32.totalorder %s14, 1
      %p74 = scmp.ne.s32.totalorder %s69, %s71
      %p75 = scmp.eq.s32.totalorder %s14, 0
      %p76 = por %p74, %p75
      %p77 = scmp.ne.s32.totalorder %s69, %s71
      %p78 = scmp.eq.s32.totalorder %s19, 1
      %p79 = por %p77, %p78
      %p80 = scmp.ne.s32.totalorder %s71, %s72
      %p81 = scmp.eq.s32.totalorder %s19, 0
      %p82 = por %p80, %p81
      %p83 = scmp.ne.s32.totalorder %s71, %s72
      %p84 = scmp.eq.s32.totalorder %s20, 1
      %p85 = por %p83, %p84
      %p87 = scmp.ne.s32.totalorder %s72, %s86
      %p88 = scmp.eq.s32.totalorder %s20, 0
      %p89 = por %p87, %p88
      %s91 = sadd.s32 %s90, 1
      %p94 = scmp.eq.s32.totalorder %s14, 1
      %p95 = scmp.ne.s32.totalorder %s90, %s92
      %p96 = scmp.eq.s32.totalorder %s14, 0
      %p97 = por %p95, %p96
      %p98 = scmp.ne.s32.totalorder %s90, %s92
      %p99 = scmp.eq.s32.totalorder %s19, 1
      %p100 = por %p98, %p99
      %p101 = scmp.ne.s32.totalorder %s92, %s93
      %p102 = scmp.eq.s32.totalorder %s19, 0
      %p103 = por %p101, %p102
      %p104 = scmp.ne.s32.totalorder %s92, %s93
      %p105 = scmp.eq.s32.totalorder %s20, 1
      %p106 = por %p104, %p105
      %p108 = scmp.ne.s32.totalorder %s93, %s107
      %p109 = scmp.eq.s32.totalorder %s20, 0
      %p110 = por %p108, %p109
      %s112 = sadd.s32 %s111, 1
      %p115 = scmp.eq.s32.totalorder %s14, 1
      %p116 = scmp.ne.s32.totalorder %s111, %s113
      %p117 = scmp.eq.s32.totalorder %s14, 0
      %p118 = por %p116, %p117
      %p119 = scmp.ne.s32.totalorder %s111, %s113
      %p120 = scmp.eq.s32.totalorder %s19, 1
      %p121 = por %p119, %p120
      %p122 = scmp.ne.s32.totalorder %s113, %s114
      %p123 = scmp.eq.s32.totalorder %s19, 0
      %p124 = por %p122, %p123
      %p125 = scmp.ne.s32.totalorder %s113, %s114
      %p126 = scmp.eq.s32.totalorder %s20, 1
      %p127 = por %p125, %p126
      %p129 = scmp.ne.s32.totalorder %s114, %s128
      %p130 = scmp.eq.s32.totalorder %s20, 0
      %p131 = por %p129, %p130
      %s132 = ssub.s32 %s14, %s21
      %p133 = scmp.eq.s32.totalorder %s132, 0
      %s135 = sadd.s32 %s134, 1
      %s136 = scalar_select %p133, %s134, %s135
      %p139 = pneg %p133
      %p140 = scmp.eq.s32.totalorder %s14, 1
      %p141 = por %p139, %p140
      %p142 = scmp.ne.s32.totalorder %s134, %s137
      %p143 = scmp.eq.s32.totalorder %s14, 0
      %p144 = por %p142, %p143
      %p145 = scmp.ne.s32.totalorder %s134, %s137
      %p146 = scmp.eq.s32.totalorder %s19, 1
      %p147 = por %p145, %p146
      %p148 = scmp.ne.s32.totalorder %s137, %s138
      %p149 = scmp.eq.s32.totalorder %s19, 0
      %p150 = por %p148, %p149
      %p151 = scmp.ne.s32.totalorder %s137, %s138
      %p152 = scmp.eq.s32.totalorder %s20, 1
      %p153 = por %p151, %p152
      %p155 = scmp.ne.s32.totalorder %s138, %s154
      %p156 = scmp.eq.s32.totalorder %s20, 0
      %p157 = por %p155, %p156
      %p158 = scmp.le.s32.totalorder 1, %s14
      %p159 = scmp.lt.s32.totalorder %s14, 3
      %p160 = pnand %p158, %p159
      %p161 = pneg %p160
      // Predicated region
      $region9: #{tpu_custom_call.1} parent=5 // pred_check
        _
      $region10: #{tpu_custom_call.1} parent=5 // pred_check_branch
        %163 = sbr.rel (%p160) target = $region12
      $region11: #{tpu_custom_call.1} parent=5 // pred_region
        %s164 = ssub.s32 %s14, 1
        // Predicated region
        $region13: #{tpu_custom_call.1} parent=11 // pred_check
          %p165 = pneg %p61
        $region14: #{tpu_custom_call.1} parent=11 // pred_check_branch
          %167 = sbr.rel (%p165) target = $region16
        $region15: #{tpu_custom_call.1} parent=11 // pred_region
          _
        $region16: #{tpu_custom_call.1} parent=11 // pred_fallthru
          _
        // Predicated region
        $region17: #{tpu_custom_call.1} parent=11 // pred_check
          %p168 = pneg %p82
        $region18: #{tpu_custom_call.1} parent=11 // pred_check_branch
          %170 = sbr.rel (%p168) target = $region20
        $region19: #{tpu_custom_call.1} parent=11 // pred_region
          _
        $region20: #{tpu_custom_call.1} parent=11 // pred_fallthru
          _
        // Predicated region
        $region21: #{tpu_custom_call.1} parent=11 // pred_check
          %p171 = pneg %p103
        $region22: #{tpu_custom_call.1} parent=11 // pred_check_branch
          %173 = sbr.rel (%p171) target = $region24
        $region23: #{tpu_custom_call.1} parent=11 // pred_region
          _
        $region24: #{tpu_custom_call.1} parent=11 // pred_fallthru
          _
        // Predicated region
        $region25: #{tpu_custom_call.1} parent=11 // pred_check
          %p174 = pneg %p124
        $region26: #{tpu_custom_call.1} parent=11 // pred_check_branch
          %176 = sbr.rel (%p174) target = $region28
        $region27: #{tpu_custom_call.1} parent=11 // pred_region
          _
        $region28: #{tpu_custom_call.1} parent=11 // pred_fallthru
          _
      $region12: #{tpu_custom_call.1} parent=5 // pred_fallthru
        _
      %p177 = scmp.lt.s32.totalorder %s14, 2
      // Predicated region
      $region29: #{tpu_custom_call.1} parent=5 // pred_check
        %p178 = pneg %p177
      $region30: #{tpu_custom_call.1} parent=5 // pred_check_branch
        %180 = sbr.rel (%p178) target = $region32
      $region31: #{tpu_custom_call.1} parent=5 // pred_region
        // Predicated region
        $region33: #{tpu_custom_call.1} parent=31 // pred_check
          %p181 = pneg %p34
        $region34: #{tpu_custom_call.1} parent=31 // pred_check_branch
          %183 = sbr.rel (%p181) target = $region36
        $region35: #{tpu_custom_call.1} parent=31 // pred_region
          %s184 = sand.u32 %s24, 1
          %s185 = scalar_lea.sflag [#allocation3], %s184
          %s186 = sand.u32 %s24, 1
          %s187 = smul.addr %s186, 8
          %s188 = scalar_lea.vmem [#allocation2], %s187
          %s190 = ssub.s32 128, 128
          %191 = vsyncadd %s185, %s190
          %s192 = smul.addr %s14, 128
          %s193 = scalar_lea.hbm %s0, %s192
          %s195 = sshll.u32 %s188, 4
          %s196 = int_to_ptr.vmem [resolvable:$true] %s195
          %198 = dma.hbm_to_vmem [thread:$0]  %s193, 128, %s196, %s185
        $region36: #{tpu_custom_call.1} parent=31 // pred_fallthru
          _
      $region32: #{tpu_custom_call.1} parent=5 // pred_fallthru
        _
      %p199 = scmp.le.s32.totalorder 1, %s14
      %p200 = scmp.lt.s32.totalorder %s14, 3
      %p201 = pnand %p199, %p200
      %p202 = pneg %p201
      // Predicated region
      $region37: #{tpu_custom_call.1} parent=5 // pred_check
        _
      $region38: #{tpu_custom_call.1} parent=5 // pred_check_branch
        %204 = sbr.rel (%p201) target = $region40
      $region39: #{tpu_custom_call.1} parent=5 // pred_region
        %s205 = ssub.s32 %s14, 1
        %s206 = sand.u32 %s27, 1
        %s207 = scalar_lea.sflag [#allocation3], %s206
        %s208 = sand.u32 %s27, 1
        %s209 = smul.addr %s208, 8
        %s210 = scalar_lea.vmem [#allocation2], %s209
        // Predicated region
        $region41: #{tpu_custom_call.1} parent=39 // pred_check
          %p211 = pneg %p40
        $region42: #{tpu_custom_call.1} parent=39 // pred_check_branch
          %213 = sbr.rel (%p211) target = $region44
        $region43: #{tpu_custom_call.1} parent=39 // pred_region
          %214 = dma.done %s207, 128
        $region44: #{tpu_custom_call.1} parent=39 // pred_fallthru
          _
        %s215 = sand.u32 %s27, 1
        %s216 = scalar_lea.sflag [#allocation3], %s215
        %s217 = sand.u32 %s27, 1
        %s218 = smul.addr %s217, 8
        %s219 = scalar_lea.vmem [#allocation2], %s218
        %p220 = pneg %p40
        %p221 = pneg %p37
        %p222 = pneg %p61
        %p223 = pneg %p58
        %p224 = pneg %p82
        %p225 = pneg %p79
        %p226 = pneg %p103
        %p227 = pneg %p100
        %p228 = pneg %p124
        %p229 = pneg %p121
        %p230 = pneg %p150
        %p231 = pneg %p147
        %p232 = scmp.lt.s32.totalorder %s19, 1
        %s233 = scalar_select %p232, %s19, 1
        %s234 = smul.addr %s233, 8
        %s235 = scalar_lea.vmem %s5, %s234
        %p236 = scmp.lt.s32.totalorder %s19, 1
        %s237 = scalar_select %p236, %s19, 1
        %s238 = smul.addr %s237, 8
        %s239 = scalar_lea.vmem %s5, %s238
        %v240 = vld [vmem:[%s210] sm:$0xff]
        %v241 = vld [vmem:[%s1] sm:$0xff]
        %v242 = vld [vmem:[%s1 + $0x8] sm:$0xff]
        %v243 = vld [vmem:[%s1 + $0x10] sm:$0xff]
        %v244 = vld [vmem:[%s1 + $0x18] sm:$0xff]
        %v245 = vld [vmem:[%s2] sm:$0x1]
        %v247 = vlaneseq
        %v248 = vshrl.u32 %v247, 7
        %v249 = vsub.s32 0, %v248
        %v250 = vrot.slane %v245, %v249
        %vm252 = vcmask 261120
        %v254 = vsel %vm252, %v240, 0
        %256 = vmatprep.subr.mxu0 0.0
        %257 = vmatpush1.msra.mxu0 %v241
        %258 = vmatprep.subr.mxu0 0.0
        %259 = vmatpush1.msra.mxu0 %v242
        %260 = vmatprep.subr.mxu0 0.0
        %261 = vmatpush1.msra.mxu0 %v243
        %262 = vmatprep.subr.mxu0 0.0
        %263 = vmatpush1.msra.mxu0 %v244
        %264 = vmatprep.subr.mxu0 0.0
        %265 = vmatpush1.msra.mxu0 0.0
        %266 = vmatprep.subr.mxu0 0.0
        %267 = vmatpush1.msra.mxu0 0.0
        %268 = vmatprep.subr.mxu0 0.0
        %269 = vmatpush1.msra.mxu0 0.0
        %270 = vmatprep.subr.mxu0 0.0
        %271 = vmatpush1.msra.mxu0 0.0
        %272 = vmatprep.subr.mxu0 0.0
        %273 = vmatpush1.msra.mxu0 0.0
        %274 = vmatprep.subr.mxu0 0.0
        %275 = vmatpush1.msra.mxu0 0.0
        %276 = vmatprep.subr.mxu0 0.0
        %277 = vmatpush1.msra.mxu0 0.0
        %278 = vmatprep.subr.mxu0 0.0
        %279 = vmatpush1.msra.mxu0 0.0
        %280 = vmatprep.subr.mxu0 0.0
        %281 = vmatpush1.msra.mxu0 0.0
        %282 = vmatprep.subr.mxu0 0.0
        %283 = vmatpush1.msra.mxu0 0.0
        %284 = vmatprep.subr.mxu0 0.0
        %285 = vmatpush1.msra.mxu0 0.0
        %286 = vmatprep.subr.mxu0 0.0
        %287 = vmatpush1.msra.mxu0 0.0
        %288 = vmatprep.subr.mxu0 0.0
        %289 = vmatpush1.msra.mxu0 0.0
        %290 = vmatprep.subr.mxu0 0.0
        %291 = vmatpush1.msra.mxu0 0.0
        %292 = vmatprep.subr.mxu0 0.0
        %293 = vmatpush1.msra.mxu0 0.0
        %294 = vmatprep.subr.mxu0 0.0
        %295 = vmatpush1.msra.mxu0 0.0
        %296 = vmatprep.subr.mxu0 0.0
        %297 = vmatpush1.msra.mxu0 0.0
        %298 = vmatprep.subr.mxu0 0.0
        %299 = vmatpush1.msra.mxu0 0.0
        %300 = vmatprep.subr.mxu0 0.0
        %301 = vmatpush1.msra.mxu0 0.0
        %302 = vmatprep.subr.mxu0 0.0
        %303 = vmatpush1.msra.mxu0 0.0
        %304 = vmatprep.subr.mxu0 0.0
        %305 = vmatpush1.msra.mxu0 0.0
        %306 = vmatprep.subr.mxu0 0.0
        %307 = vmatpush1.msra.mxu0 0.0
        %308 = vmatprep.subr.mxu0 0.0
        %309 = vmatpush1.msra.mxu0 0.0
        %310 = vmatprep.subr.mxu0 0.0
        %311 = vmatpush1.msra.mxu0 0.0
        %312 = vmatprep.subr.mxu0 0.0
        %313 = vmatpush1.msra.mxu0 0.0
        %314 = vmatprep.subr.mxu0 0.0
        %315 = vmatpush1.msra.mxu0 0.0
        %316 = vmatprep.subr.mxu0 0.0
        %317 = vmatpush1.msra.mxu0 0.0
        %318 = vmatprep.subr.mxu0 0.0
        %319 = vmatpush1.msra.mxu0 0.0
        %320 = vmatprep.mubr.f32.mxu0 0.0
        %321 = vmatmul.mubr.f32.gmra.mrb[0].mxu0 %v254
        %v322 = vpop.f32.mrb[0].mxu0
        %v323 = vadd.f32 %v250, %v322
        %v324 = vpop.f32.mrb[0].mxu0
        %325 = vdwg.mxu0
        %v326 = vmax.f32 %v323, 0.0
        %v327 = vld [vmem:[%s3] sm:$0xff]
        %v328 = vld [vmem:[%s3 + $0x8] sm:$0xff]
        %v329 = vld [vmem:[%s3 + $0x10] sm:$0xff]
        %v330 = vld [vmem:[%s3 + $0x18] sm:$0xff]
        %v331 = vld [vmem:[%s4] sm:$0x1]
        %v333 = vlaneseq
        %v334 = vshrl.u32 %v333, 7
        %v335 = vsub.s32 0, %v334
        %v336 = vrot.slane %v331, %v335
        %v339 = vsel %vm252, %v326, 0
        %341 = vmatprep.subr.mxu0 0.0
        %342 = vmatpush1.msra.mxu0 %v327
        %343 = vmatprep.subr.mxu0 0.0
        %344 = vmatpush1.msra.mxu0 %v328
        %345 = vmatprep.subr.mxu0 0.0
        %346 = vmatpush1.msra.mxu0 %v329
        %347 = vmatprep.subr.mxu0 0.0
        %348 = vmatpush1.msra.mxu0 %v330
        %349 = vmatprep.subr.mxu0 0.0
        %350 = vmatpush1.msra.mxu0 0.0
        %351 = vmatprep.subr.mxu0 0.0
        %352 = vmatpush1.msra.mxu0 0.0
        %353 = vmatprep.subr.mxu0 0.0
        %354 = vmatpush1.msra.mxu0 0.0
        %355 = vmatprep.subr.mxu0 0.0
        %356 = vmatpush1.msra.mxu0 0.0
        %357 = vmatprep.subr.mxu0 0.0
        %358 = vmatpush1.msra.mxu0 0.0
        %359 = vmatprep.subr.mxu0 0.0
        %360 = vmatpush1.msra.mxu0 0.0
        %361 = vmatprep.subr.mxu0 0.0
        %362 = vmatpush1.msra.mxu0 0.0
        %363 = vmatprep.subr.mxu0 0.0
        %364 = vmatpush1.msra.mxu0 0.0
        %365 = vmatprep.subr.mxu0 0.0
        %366 = vmatpush1.msra.mxu0 0.0
        %367 = vmatprep.subr.mxu0 0.0
        %368 = vmatpush1.msra.mxu0 0.0
        %369 = vmatprep.subr.mxu0 0.0
        %370 = vmatpush1.msra.mxu0 0.0
        %371 = vmatprep.subr.mxu0 0.0
        %372 = vmatpush1.msra.mxu0 0.0
        %373 = vmatprep.subr.mxu0 0.0
        %374 = vmatpush1.msra.mxu0 0.0
        %375 = vmatprep.subr.mxu0 0.0
        %376 = vmatpush1.msra.mxu0 0.0
        %377 = vmatprep.subr.mxu0 0.0
        %378 = vmatpush1.msra.mxu0 0.0
        %379 = vmatprep.subr.mxu0 0.0
        %380 = vmatpush1.msra.mxu0 0.0
        %381 = vmatprep.subr.mxu0 0.0
        %382 = vmatpush1.msra.mxu0 0.0
        %383 = vmatprep.subr.mxu0 0.0
        %384 = vmatpush1.msra.mxu0 0.0
        %385 = vmatprep.subr.mxu0 0.0
        %386 = vmatpush1.msra.mxu0 0.0
        %387 = vmatprep.subr.mxu0 0.0
        %388 = vmatpush1.msra.mxu0 0.0
        %389 = vmatprep.subr.mxu0 0.0
        %390 = vmatpush1.msra.mxu0 0.0
        %391 = vmatprep.subr.mxu0 0.0
        %392 = vmatpush1.msra.mxu0 0.0
        %393 = vmatprep.subr.mxu0 0.0
        %394 = vmatpush1.msra.mxu0 0.0
        %395 = vmatprep.subr.mxu0 0.0
        %396 = vmatpush1.msra.mxu0 0.0
        %397 = vmatprep.subr.mxu0 0.0
        %398 = vmatpush1.msra.mxu0 0.0
        %399 = vmatprep.subr.mxu0 0.0
        %400 = vmatpush1.msra.mxu0 0.0
        %401 = vmatprep.subr.mxu0 0.0
        %402 = vmatpush1.msra.mxu0 0.0
        %403 = vmatprep.subr.mxu0 0.0
        %404 = vmatpush1.msra.mxu0 0.0
        %405 = vmatprep.mubr.f32.mxu0 0.0
        %406 = vmatmul.mubr.f32.gmra.mrb[0].mxu0 %v339
        %v407 = vpop.f32.mrb[0].mxu0
        %v408 = vadd.f32 %v336, %v407
        %v409 = vpop.f32.mrb[0].mxu0
        %410 = vdwg.mxu0
        %vm411 = vcmask 31744
        %412 = vst.msk [vmem:[%s239] sm:$0xff] %vm411, %v408
        %p413 = scmp.lt.s32.totalorder %s19, 1
        %s414 = scalar_select %p413, %s19, 1
        %s415 = smul.addr %s414, 8
        %s416 = scalar_lea.vmem %s5, %s415
        // Predicated region
        $region45: #{tpu_custom_call.1} parent=39 // pred_check
          %p417 = pneg %p147
        $region46: #{tpu_custom_call.1} parent=39 // pred_check_branch
          %419 = sbr.rel (%p417) target = $region48
        $region47: #{tpu_custom_call.1} parent=39 // pred_region
          _
        $region48: #{tpu_custom_call.1} parent=39 // pred_fallthru
          _
      $region40: #{tpu_custom_call.1} parent=5 // pred_fallthru
        _
      %p420 = scmp.le.s32.totalorder 2, %s14
      // Predicated region
      $region49: #{tpu_custom_call.1} parent=5 // pred_check
        %p421 = pneg %p420
      $region50: #{tpu_custom_call.1} parent=5 // pred_check_branch
        %423 = sbr.rel (%p421) target = $region52
      $region51: #{tpu_custom_call.1} parent=5 // pred_region
        %s424 = ssub.s32 %s14, 2
        // Predicated region
        $region53: #{tpu_custom_call.1} parent=51 // pred_check
          %p425 = pneg %p153
        $region54: #{tpu_custom_call.1} parent=51 // pred_check_branch
          %427 = sbr.rel (%p425) target = $region56
        $region55: #{tpu_custom_call.1} parent=51 // pred_region
          %p428 = scmp.lt.s32.totalorder %s20, 1
          %s429 = scalar_select %p428, %s20, 1
          %s430 = smul.addr %s429, 8
          %s431 = scalar_lea.vmem %s5, %s430
        $region56: #{tpu_custom_call.1} parent=51 // pred_fallthru
          _
      $region52: #{tpu_custom_call.1} parent=5 // pred_fallthru
        _
    $region6: #{tpu_custom_call.1} parent=1 // loop_footer
      %s18 = sadd.s32 1, %s14
    $region7: #{tpu_custom_call.1} parent=1 // loop_footer_branch
      %13 = sbr.rel target = $region3
    $region8: #{tpu_custom_call.1} parent=1 // loop_exit
      _
    %432 = vsyncpa [#allocation3], 1
    %s433 = scalar_lea.sflag [#allocation3], 1
    %434 = vsyncpa %s433, 1

</llo_original>
